<compile_context>
chip_gen: v7x
topology: tpu7x:2x2x1
jax: 0.10.0
libtpu: 0.0.40
codegen_flags: <defaults>
</compile_context>

<pallas_src>
import jax
import jax.numpy as jnp
from jax import lax
from jax.experimental import pallas as pl
from jax.experimental.pallas import tpu as pltpu


def _round_up(x, m):
    return ((x + m - 1) // m) * m


def _flatten_head_kernel(x_ref, w_ref, b_ref, o_ref, acc_ref):
    # x_ref:   [tm, tk]      (bf16)   activations chunk
    # w_ref:   [tw_pad, tk]  (bf16)   weight chunk in native [out, in] layout
    # b_ref:   [1, tw_pad]   (f32)    bias row
    # o_ref:   [tm, tw_pad]           output tile (resident across k)
    # acc_ref: [tm, tw_pad]  (f32)    VMEM accumulator
    k = pl.program_id(1)

    @pl.when(k == 0)
    def _():
        acc_ref[...] = jnp.zeros_like(acc_ref)

    # Contract last dims: x[m, k] . w[n, k] -> [m, n]  (MXU, f32 accumulation).
    acc_ref[...] += lax.dot_general(
        x_ref[...], w_ref[...],
        dimension_numbers=(((1,), (1,)), ((), ())),
        preferred_element_type=jnp.float32)

    @pl.when(k == pl.num_programs(1) - 1)
    def _():
        o_ref[...] = (acc_ref[...] + b_ref[...]).astype(o_ref.dtype)


def flatten_head(x, weight, bias, *, tm=None, tk=None,
                 compute_dtype=jnp.bfloat16, out_dtype=None):
    """x: [B, n_vars, d_model, patch_num]; weight: [target_window, nf]; bias: [target_window]."""
    B, n_vars, d_model, patch_num = x.shape
    nf = d_model * patch_num
    tw = weight.shape[0]
    assert weight.shape == (tw, nf)
    assert bias.shape == (tw,)
    out_dtype = out_dtype or x.dtype

    M = B * n_vars

    # ---- tile selection -------------------------------------------------------
    unit = 32  # sublane-pack friendly for both f32 (8) and bf16 (16)
    if tm is None:
        m_unit = _round_up(M, unit)
        # Prefer >=2 row tiles (v7x has 2 TensorCores) while keeping MXU-sized tiles.
        tm = min(256, max(unit, _round_up(-(-m_unit // 2), unit)))
    M_pad = _round_up(M, tm)

    if tk is None:
        tk = min(_round_up(nf, 128), 512)
    nf_pad = _round_up(nf, tk)

    tw_pad = _round_up(tw, 128)  # lane-dense output / weight / bias

    # ---- layout glue (zero-padding is exact for the matmul; sliced off below) --
    x2d = x.reshape(M, nf)
    x2d = jnp.pad(x2d, ((0, M_pad - M), (0, nf_pad - nf))).astype(compute_dtype)
    w2d = jnp.pad(weight, ((0, tw_pad - tw), (0, nf_pad - nf))).astype(compute_dtype)
    b2d = jnp.pad(bias, (0, tw_pad - tw)).astype(jnp.float32).reshape(1, tw_pad)

    grid_m = M_pad // tm
    grid_k = nf_pad // tk

    # ---- compiler hints -------------------------------------------------------
    in_item = jnp.dtype(compute_dtype).itemsize
    out_item = jnp.dtype(out_dtype).itemsize
    vmem_bytes = (2 * (tm * tk + tw_pad * tk) * in_item        # double-buffered x, w
                  + 2 * tm * tw_pad * out_item                 # double-buffered out
                  + tm * tw_pad * 4                            # f32 accumulator
                  + 2 * tw_pad * 4)                            # bias
    vmem_limit = min(max(32 << 20, int(vmem_bytes * 2)), 48 << 20)  # safe on v5e/v6e/v7x

    cost = pl.CostEstimate(
        flops=2 * M_pad * nf_pad * tw_pad,
        transcendentals=0,
        bytes_accessed=(M_pad * nf_pad + tw_pad * nf_pad) * in_item
                       + M_pad * tw_pad * out_item)

    out2d = pl.pallas_call(
        _flatten_head_kernel,
        out_shape=jax.ShapeDtypeStruct((M_pad, tw_pad), out_dtype),
        grid_spec=pltpu.PrefetchScalarGridSpec(
            num_scalar_prefetch=0,
            grid=(grid_m, grid_k),
            in_specs=[
                pl.BlockSpec((tm, tk), lambda i, k: (i, k)),        # activations
                pl.BlockSpec((tw_pad, tk), lambda i, k: (0, k)),    # weight chunk
                pl.BlockSpec((1, tw_pad), lambda i, k: (0, 0)),     # bias row
            ],
            out_specs=pl.BlockSpec((tm, tw_pad), lambda i, k: (i, 0)),
            scratch_shapes=[pltpu.VMEM((tm, tw_pad), jnp.float32)],
        ),
        compiler_params=pltpu.CompilerParams(
            dimension_semantics=("parallel", "arbitrary"),
            vmem_limit_bytes=vmem_limit),
        cost_estimate=cost,
    )(x2d, w2d, b2d)

    # Drop row/lane padding, restore [B, n_vars, target_window].
    return out2d[:M, :tw].reshape(B, n_vars, tw)


if __name__ == "__main__":
    # Small shapes consistent with the module's forward.
    B, n_vars, d_model, patch_num = 2, 4, 16, 8
    nf = d_model * patch_num          # 128
    target_window = 32

    key = jax.random.PRNGKey(0)
    kx, kw, kb = jax.random.split(key, 3)

    x = jax.random.normal(kx, (B, n_vars, d_model, patch_num), dtype=jnp.float32)
    # nn.Linear params: weight [out, in], bias [out].
    weight = jax.random.normal(kw, (target_window, nf), dtype=jnp.float32) * 0.02
    bias = jax.random.normal(kb, (target_window,), dtype=jnp.float32) * 0.02

    out = flatten_head(x, weight, bias)
    out = jax.block_until_ready(out)
    assert out.shape == (B, n_vars, target_window)

    # References: bf16-operand / f32-accumulate (matches kernel numerics) and pure f32.
    x2d = x.reshape(B, n_vars, nf)
    ref_bf16 = (x2d.astype(jnp.bfloat16).astype(jnp.float32)
                @ weight.astype(jnp.bfloat16).astype(jnp.float32).T + bias)
    ref_f32 = x2d @ weight.T + bias

    assert jnp.allclose(out, ref_bf16, atol=1e-3, rtol=1e-3), "mismatch vs bf16-aware reference"
    assert jnp.allclose(out, ref_f32, atol=5e-2, rtol=5e-2), "mismatch vs f32 reference"

    # Dropout(p=head_dropout) is identity in eval / p=0, so it is omitted.
    print("KERNEL_OK")
</pallas_src>

<mosaic_0001>
module attributes {stable_mosaic.version = 11 : i64} {
  func.func @_flatten_head_kernel(%arg0: i32, %arg1: i32, %arg2: memref<32x128xbf16, #tpu.memory_space<vmem>>, %arg3: memref<128x128xbf16, #tpu.memory_space<vmem>>, %arg4: memref<1x128xf32, #tpu.memory_space<vmem>>, %arg5: memref<32x128xf32, #tpu.memory_space<vmem>>, %arg6: memref<32x128xf32, #tpu.memory_space<vmem>>) attributes {dimension_semantics = [#tpu.dimension_semantics<parallel>, #tpu.dimension_semantics<arbitrary>], iteration_bounds = array<i64: 1, 1>, scalar_prefetch = 0 : i64, scratch_operands = 1 : i64, tpu.core_type = #tpu.core_type<tc>, window_params = [{transform_indices = @transform_0, window_bounds = array<i64: 32, 128>}, {transform_indices = @transform_1, window_bounds = array<i64: 128, 128>}, {pipeline_mode = #tpu.pipeline_mode<synchronous>, transform_indices = @transform_2, window_bounds = array<i64: 1, 128>}, {transform_indices = @transform_3, window_bounds = array<i64: 32, 128>}]} {
    %c0_i32 = arith.constant 0 : i32
    %0 = arith.cmpi eq, %arg1, %c0_i32 : i32
    %1 = arith.extui %0 : i1 to i32
    %c0_i32_0 = arith.constant 0 : i32
    %2 = arith.cmpi ne, %1, %c0_i32_0 : i32
    scf.if %2 {
      %cst_10 = arith.constant 0.000000e+00 : f32
      %12 = vector.broadcast %cst_10 : f32 to vector<32x128xf32>
      %c0_11 = arith.constant 0 : index
      %c0_12 = arith.constant 0 : index
      %13 = vector.load %arg6[%c0_11, %c0_12] : memref<32x128xf32, #tpu.memory_space<vmem>>, vector<32x128xf32>
      tpu.vector_store %arg6[%c0_11, %c0_12], %12 {strides = array<i32>} : memref<32x128xf32, #tpu.memory_space<vmem>>, vector<32x128xf32>,
    } else {
    }
    %c0 = arith.constant 0 : index
    %c0_1 = arith.constant 0 : index
    %3 = vector.load %arg6[%c0, %c0_1] : memref<32x128xf32, #tpu.memory_space<vmem>>, vector<32x128xf32>
    %c0_2 = arith.constant 0 : index
    %c0_3 = arith.constant 0 : index
    %4 = vector.load %arg2[%c0_2, %c0_3] : memref<32x128xbf16, #tpu.memory_space<vmem>>, vector<32x128xbf16>
    %c0_4 = arith.constant 0 : index
    %c0_5 = arith.constant 0 : index
    %5 = vector.load %arg3[%c0_4, %c0_5] : memref<128x128xbf16, #tpu.memory_space<vmem>>, vector<128x128xbf16>
    %cst = arith.constant dense<0.000000e+00> : vector<32x128xf32>
    %6 = tpu.matmul %4, %5, %cst {dimension_numbers = #tpu.dot_dimension_numbers<[1], [1], [0], [0], [0, 0, 1, 0], [], []>} : vector<32x128xbf16>, vector<128x128xbf16>, vector<32x128xf32> -> vector<32x128xf32>
    %7 = arith.addf %3, %6 : vector<32x128xf32>
    %c0_6 = arith.constant 0 : index
    %c0_7 = arith.constant 0 : index
    %8 = vector.load %arg6[%c0_6, %c0_7] : memref<32x128xf32, #tpu.memory_space<vmem>>, vector<32x128xf32>
    tpu.vector_store %arg6[%c0_6, %c0_7], %7 {strides = array<i32>} : memref<32x128xf32, #tpu.memory_space<vmem>>, vector<32x128xf32>,
    %c0_i32_8 = arith.constant 0 : i32
    %9 = arith.cmpi eq, %arg1, %c0_i32_8 : i32
    %10 = arith.extui %9 : i1 to i32
    %c0_i32_9 = arith.constant 0 : i32
    %11 = arith.cmpi ne, %10, %c0_i32_9 : i32
    scf.if %11 {
      %c0_10 = arith.constant 0 : index
      %c0_11 = arith.constant 0 : index
      %12 = vector.load %arg6[%c0_10, %c0_11] : memref<32x128xf32, #tpu.memory_space<vmem>>, vector<32x128xf32>
      %c0_12 = arith.constant 0 : index
      %c0_13 = arith.constant 0 : index
      %13 = vector.load %arg4[%c0_12, %c0_13] : memref<1x128xf32, #tpu.memory_space<vmem>>, vector<1x128xf32>
      %14 = vector.broadcast %13 : vector<1x128xf32> to vector<32x128xf32>
      %15 = arith.addf %12, %14 : vector<32x128xf32>
      %c0_14 = arith.constant 0 : index
      %c0_15 = arith.constant 0 : index
      %16 = vector.load %arg5[%c0_14, %c0_15] : memref<32x128xf32, #tpu.memory_space<vmem>>, vector<32x128xf32>
      tpu.vector_store %arg5[%c0_14, %c0_15], %15 {strides = array<i32>} : memref<32x128xf32, #tpu.memory_space<vmem>>, vector<32x128xf32>,
    } else {
    }
    return
  }
  func.func @transform_0(%arg0: i32, %arg1: i32) -> (i32, i32) {
    %c0_i32 = arith.constant 0 : i32
    return %arg0, %arg1 : i32, i32
  }
  func.func @transform_1(%arg0: i32, %arg1: i32) -> (i32, i32) {
    %c0_i32 = arith.constant 0 : i32
    %c0_i32_0 = arith.constant 0 : i32
    return %c0_i32, %arg1 : i32, i32
  }
  func.func @transform_2(%arg0: i32, %arg1: i32) -> (i32, i32) {
    %c0_i32 = arith.constant 0 : i32
    %c0_i32_0 = arith.constant 0 : i32
    %c0_i32_1 = arith.constant 0 : i32
    return %c0_i32, %c0_i32_0 : i32, i32
  }
  func.func @transform_3(%arg0: i32, %arg1: i32) -> (i32, i32) {
    %c0_i32 = arith.constant 0 : i32
    %c0_i32_0 = arith.constant 0 : i32
    return %arg0, %c0_i32 : i32, i32
  }
}

</mosaic_0001>

<llo_original>
// kernel: tpu_custom_call.1
$region0: #{tpu_custom_call.1}
  #allocation0 [shape = 'u32[]', space=smem, size = 0x4, offset = 0x4, fixed_abs, tag = 'smem constant byte address 0x4 - core index']
  #allocation1 [shape = 'u32[144,128]{1,0:T(1,128)}', space=vmem, size = 0x12000, scoped, tag = 'internal scratch']
  #allocation2 [shape = 'f32[32,128]{1,0:T(8,128)}', space=vmem, size = 0x4000, scoped, tag = 'scratch operand']
  %s0 = inlined_call_operand.hbm [shape: bf16[32,128], index: 0, kind: input, shape index: {}]
  %s1 = inlined_call_operand.hbm [shape: bf16[128,128], index: 1, kind: input, shape index: {}]
  %s2 = inlined_call_operand.vmem [shape: f32[1,128], index: 2, kind: input, shape index: {}]
  %s3 = inlined_call_operand.hbm [shape: f32[32,128], index: 3, kind: output, shape index: {}]
  %s4 = sld [smem:[#allocation0]]
  $region38: #{tpu_custom_call.1} parent=0
    _
  %s6 = ssub.s32 1, %s4
  %s7 = scalar_select 0, %s6, %s4
  $region1: #{tpu_custom_call.1} parent=0
    #allocation3 [shape = 'u8[8192]{0}', space=vmem, size = 0x2000, scoped, tag = 'input window, operand 0, single buffered']
    #allocation4 [shape = 's32[1]{0}', space=sflag, size = 0x4, scoped, tag = 'scoped memory for tpu_custom_call.1']
    #allocation5 [shape = 's32[1]{0}', space=sflag, size = 0x4, scoped, tag = 'scoped memory for tpu_custom_call.1']
    #allocation6 [shape = 'u8[32768]{0}', space=vmem, size = 0x8000, scoped, tag = 'input window, operand 1, single buffered']
    #allocation7 [shape = 's32[1]{0}', space=sflag, size = 0x4, scoped, tag = 'scoped memory for tpu_custom_call.1']
    #allocation8 [shape = 'u8[16384]{0}', space=vmem, size = 0x4000, scoped, tag = 'output window, operand 0, single buffered']
    %8 = vsyncpa [#allocation4], 0
    %9 = vsyncpa [#allocation7], 0
    %10 = vsyncpa [#allocation5], 0
    // Predicated region
    $region2: #{tpu_custom_call.1} parent=1 // pred_check
      _
    $region3: #{tpu_custom_call.1} parent=1 // pred_check_branch
      %12 = sbr.rel (0) target = $region5
    $region4: #{tpu_custom_call.1} parent=1 // pred_region
      %s14 = ssub.s32 256, 256
      %15 = vsyncadd [#allocation4], %s14
      %s16 = sshll.u32 [#allocation3], 4
      %s17 = int_to_ptr.vmem [resolvable:$true] %s16
      %22 = dma.hbm_to_vmem [thread:$0]  %s0, 256, %s17, [#allocation4], 64, 64, 4
    $region5: #{tpu_custom_call.1} parent=1 // pred_fallthru
      _
    // Predicated region
    $region6: #{tpu_custom_call.1} parent=1 // pred_check
      _
    $region7: #{tpu_custom_call.1} parent=1 // pred_check_branch
      %24 = sbr.rel (0) target = $region9
    $region8: #{tpu_custom_call.1} parent=1 // pred_region
      %s26 = ssub.s32 1024, 1024
      %27 = vsyncadd [#allocation7], %s26
      %s28 = sshll.u32 [#allocation6], 4
      %s29 = int_to_ptr.vmem [resolvable:$true] %s28
      %34 = dma.hbm_to_vmem [thread:$0]  %s1, 1024, %s29, [#allocation7], 64, 64, 4
    $region9: #{tpu_custom_call.1} parent=1 // pred_fallthru
      _
    // Predicated region
    $region10: #{tpu_custom_call.1} parent=1 // pred_check
      _
    $region11: #{tpu_custom_call.1} parent=1 // pred_check_branch
      %36 = sbr.rel (0) target = $region13
    $region12: #{tpu_custom_call.1} parent=1 // pred_region
      _
    $region13: #{tpu_custom_call.1} parent=1 // pred_fallthru
      _
    // Predicated region
    $region14: #{tpu_custom_call.1} parent=1 // pred_check
      _
    $region15: #{tpu_custom_call.1} parent=1 // pred_check_branch
      %38 = sbr.rel (0) target = $region17
    $region16: #{tpu_custom_call.1} parent=1 // pred_region
      %39 = dma.done [#allocation4], 256
    $region17: #{tpu_custom_call.1} parent=1 // pred_fallthru
      _
    // Predicated region
    $region18: #{tpu_custom_call.1} parent=1 // pred_check
      _
    $region19: #{tpu_custom_call.1} parent=1 // pred_check_branch
      %41 = sbr.rel (0) target = $region21
    $region20: #{tpu_custom_call.1} parent=1 // pred_region
      %42 = dma.done [#allocation7], 1024
    $region21: #{tpu_custom_call.1} parent=1 // pred_fallthru
      _
    %p44 = scmp.eq.s32.totalorder 0, 0
    // Predicated region
    $region22: #{tpu_custom_call.1} parent=1 // pred_check
      %p45 = pneg %p44
    $region23: #{tpu_custom_call.1} parent=1 // pred_check_branch
      %47 = sbr.rel (%p45) target = $region25
    $region24: #{tpu_custom_call.1} parent=1 // pred_region
      %48 = vst [vmem:[#allocation2] sm:$0xff] 0.0
      %49 = vst [vmem:[#allocation2 + $0x8] sm:$0xff] 0.0
      %50 = vst [vmem:[#allocation2 + $0x10] sm:$0xff] 0.0
      %51 = vst [vmem:[#allocation2 + $0x18] sm:$0xff] 0.0
    $region25: #{tpu_custom_call.1} parent=1 // pred_fallthru
      _
    %v52 = vld [vmem:[#allocation2] sm:$0xff]
    %v53 = vld [vmem:[#allocation2 + $0x8] sm:$0xff]
    %v54 = vld [vmem:[#allocation2 + $0x10] sm:$0xff]
    %v55 = vld [vmem:[#allocation2 + $0x18] sm:$0xff]
    %v56 = vld [vmem:[#allocation3] sm:$0xf]
    %v57 = vld [vmem:[#allocation3 + $0x4] sm:$0xf]
    %v58 = vld [vmem:[#allocation3 + $0x8] sm:$0xf]
    %v59 = vld [vmem:[#allocation3 + $0xc] sm:$0xf]
    %v60 = vld [vmem:[#allocation6] sm:$0xf]
    %v61 = vld [vmem:[#allocation6 + $0x4] sm:$0xf]
    %v62 = vld [vmem:[#allocation6 + $0x8] sm:$0xf]
    %v63 = vld [vmem:[#allocation6 + $0xc] sm:$0xf]
    %v64 = vld [vmem:[#allocation6 + $0x10] sm:$0xf]
    %v65 = vld [vmem:[#allocation6 + $0x14] sm:$0xf]
    %v66 = vld [vmem:[#allocation6 + $0x18] sm:$0xf]
    %v67 = vld [vmem:[#allocation6 + $0x1c] sm:$0xf]
    %v68 = vld [vmem:[#allocation6 + $0x20] sm:$0xf]
    %v69 = vld [vmem:[#allocation6 + $0x24] sm:$0xf]
    %v70 = vld [vmem:[#allocation6 + $0x28] sm:$0xf]
    %v71 = vld [vmem:[#allocation6 + $0x2c] sm:$0xf]
    %v72 = vld [vmem:[#allocation6 + $0x30] sm:$0xf]
    %v73 = vld [vmem:[#allocation6 + $0x34] sm:$0xf]
    %v74 = vld [vmem:[#allocation6 + $0x38] sm:$0xf]
    %v75 = vld [vmem:[#allocation6 + $0x3c] sm:$0xf]
    %v80 = vunpack.c.l.b16 %v56
    %v81 = vunpack.c.l.b16 %v57
    %v82 = vunpack.c.l.b16 %v58
    %v83 = vunpack.c.l.b16 %v59
    %v84 = vpack.c.b16 %v81, %v80
    %v85 = vpack.c.b16 %v83, %v82
    %v104 = vunpack.c.l.b16 %v60
    %v105 = vunpack.c.l.b16 %v61
    %v106 = vunpack.c.l.b16 %v62
    %v107 = vunpack.c.l.b16 %v63
    %v108 = vunpack.c.l.b16 %v64
    %v109 = vunpack.c.l.b16 %v65
    %v110 = vunpack.c.l.b16 %v66
    %v111 = vunpack.c.l.b16 %v67
    %v112 = vunpack.c.l.b16 %v68
    %v113 = vunpack.c.l.b16 %v69
    %v114 = vunpack.c.l.b16 %v70
    %v115 = vunpack.c.l.b16 %v71
    %v116 = vunpack.c.l.b16 %v72
    %v117 = vunpack.c.l.b16 %v73
    %v118 = vunpack.c.l.b16 %v74
    %v119 = vunpack.c.l.b16 %v75
    %v120 = vpack.c.b16 %v105, %v104
    %v121 = vpack.c.b16 %v107, %v106
    %v122 = vpack.c.b16 %v109, %v108
    %v123 = vpack.c.b16 %v111, %v110
    %v124 = vpack.c.b16 %v113, %v112
    %v125 = vpack.c.b16 %v115, %v114
    %v126 = vpack.c.b16 %v117, %v116
    %v127 = vpack.c.b16 %v119, %v118
    %136 = vmatprep.subr.bf16.mxu0 0
    %137 = vmatpush1.bf16.xpose.msra.mxu0 %v120
    %138 = vmatprep.subr.bf16.mxu0 0
    %139 = vmatpush1.bf16.xpose.msra.mxu0 %v121
    %140 = vmatprep.subr.bf16.mxu0 0
    %141 = vmatpush1.bf16.xpose.msra.mxu0 %v122
    %142 = vmatprep.subr.bf16.mxu0 0
    %143 = vmatpush1.bf16.xpose.msra.mxu0 %v123
    %144 = vmatprep.subr.bf16.mxu0 0
    %145 = vmatpush1.bf16.xpose.msra.mxu0 %v124
    %146 = vmatprep.subr.bf16.mxu0 0
    %147 = vmatpush1.bf16.xpose.msra.mxu0 %v125
    %148 = vmatprep.subr.bf16.mxu0 0
    %149 = vmatpush1.bf16.xpose.msra.mxu0 %v126
    %150 = vmatprep.subr.bf16.mxu0 0
    %151 = vmatpush1.bf16.xpose.msra.mxu0 %v127
    %152 = vmatprep.subr.bf16.mxu0 0
    %153 = vmatpush1.bf16.xpose.msra.mxu0 0
    %154 = vmatprep.subr.bf16.mxu0 0
    %155 = vmatpush1.bf16.xpose.msra.mxu0 0
    %156 = vmatprep.subr.bf16.mxu0 0
    %157 = vmatpush1.bf16.xpose.msra.mxu0 0
    %158 = vmatprep.subr.bf16.mxu0 0
    %159 = vmatpush1.bf16.xpose.msra.mxu0 0
    %160 = vmatprep.subr.bf16.mxu0 0
    %161 = vmatpush1.bf16.xpose.msra.mxu0 0
    %162 = vmatprep.subr.bf16.mxu0 0
    %163 = vmatpush1.bf16.xpose.msra.mxu0 0
    %164 = vmatprep.subr.bf16.mxu0 0
    %165 = vmatpush1.bf16.xpose.msra.mxu0 0
    %166 = vmatprep.subr.bf16.mxu0 0
    %167 = vmatpush1.bf16.xpose.msra.mxu0 0
    %168 = vmatprep.mubr.bf16.mxu0 0
    %169 = vmatmul.mubr.bf16.gmra.mrb[0].mxu0 %v84
    %v170 = vpop.f32.mrb[0].mxu0
    %v171 = vadd.f32 0.0, %v170
    %v172 = vpop.f32.mrb[0].mxu0
    %v173 = vpop.f32.mrb[0].mxu0
    %v174 = vadd.f32 0.0, %v173
    %v175 = vpop.f32.mrb[0].mxu0
    %176 = vmatprep.mubr.bf16.mxu0 0
    %177 = vmatmul.mubr.bf16.gmra.mrb[0].mxu0 %v85
    %v178 = vpop.f32.mrb[0].mxu0
    %v179 = vadd.f32 0.0, %v178
    %v180 = vpop.f32.mrb[0].mxu0
    %v181 = vpop.f32.mrb[0].mxu0
    %v182 = vadd.f32 0.0, %v181
    %v183 = vpop.f32.mrb[0].mxu0
    %184 = vdwg.mxu0
    %v185 = vadd.f32 %v52, %v171
    %v186 = vadd.f32 %v53, %v174
    %v187 = vadd.f32 %v54, %v179
    %v188 = vadd.f32 %v55, %v182
    %189 = vst [vmem:[#allocation2] sm:$0xff] %v185
    %190 = vst [vmem:[#allocation2 + $0x8] sm:$0xff] %v186
    %191 = vst [vmem:[#allocation2 + $0x10] sm:$0xff] %v187
    %192 = vst [vmem:[#allocation2 + $0x18] sm:$0xff] %v188
    // Predicated region
    $region26: #{tpu_custom_call.1} parent=1 // pred_check
      %p193 = pneg %p44
    $region27: #{tpu_custom_call.1} parent=1 // pred_check_branch
      %195 = sbr.rel (%p193) target = $region29
    $region28: #{tpu_custom_call.1} parent=1 // pred_region
      %v196 = vld [vmem:[#allocation2] sm:$0xff]
      %v197 = vld [vmem:[#allocation2 + $0x8] sm:$0xff]
      %v198 = vld [vmem:[#allocation2 + $0x10] sm:$0xff]
      %v199 = vld [vmem:[#allocation2 + $0x18] sm:$0xff]
      %v200 = vld [vmem:[%s2] sm:$0x1]
      %v202 = vlaneseq
      %v203 = vshrl.u32 %v202, 7
      %v204 = vsub.s32 0, %v203
      %v205 = vrot.slane %v200, %v204
      %v207 = vadd.f32 %v196, %v205
      %v208 = vadd.f32 %v197, %v205
      %v209 = vadd.f32 %v198, %v205
      %v210 = vadd.f32 %v199, %v205
      %211 = vst [vmem:[#allocation8] sm:$0xff] %v207
      %212 = vst [vmem:[#allocation8 + $0x8] sm:$0xff] %v208
      %213 = vst [vmem:[#allocation8 + $0x10] sm:$0xff] %v209
      %214 = vst [vmem:[#allocation8 + $0x18] sm:$0xff] %v210
    $region29: #{tpu_custom_call.1} parent=1 // pred_fallthru
      _
    // Predicated region
    $region30: #{tpu_custom_call.1} parent=1 // pred_check
      _
    $region31: #{tpu_custom_call.1} parent=1 // pred_check_branch
      %216 = sbr.rel (0) target = $region33
    $region32: #{tpu_custom_call.1} parent=1 // pred_region
      %s218 = ssub.s32 512, 512
      %219 = vsyncadd [#allocation5], %s218
      %s220 = sshll.u32 [#allocation8], 4
      %s221 = int_to_ptr.vmem [resolvable:$true] %s220
      %226 = dma.vmem_to_hbm [thread:$0]  %s221, 512, %s3, [#allocation5], 128, 128, 8
    $region33: #{tpu_custom_call.1} parent=1 // pred_fallthru
      _
    // Predicated region
    $region34: #{tpu_custom_call.1} parent=1 // pred_check
      _
    $region35: #{tpu_custom_call.1} parent=1 // pred_check_branch
      %228 = sbr.rel (0) target = $region37
    $region36: #{tpu_custom_call.1} parent=1 // pred_region
      %229 = dma.done [#allocation5], 512
    $region37: #{tpu_custom_call.1} parent=1 // pred_fallthru
      _
    %230 = vsyncpa [#allocation4], 1
    %231 = vsyncpa [#allocation7], 1
    %232 = vsyncpa [#allocation5], 1

</llo_original>
